<compile_context>
chip_gen: v7x
topology: tpu7x:2x2x1
jax: 0.10.0
libtpu: 0.0.40
codegen_flags: <defaults>
</compile_context>

<pallas_src>
import functools

import jax
import jax.numpy as jnp
from jax import lax
from jax.experimental import pallas as pl
from jax.experimental.pallas import tpu as pltpu


def _patch_embed_kernel(x_ref, w_ref, p_ref, o_ref, *, use_norm: bool, eps: float):
    """One (batch, token-tile) grid step.

    x_ref: (1, tl, K)  patch features (compute dtype, e.g. bf16)
    w_ref: (E, K)      flattened Conv3d weight (compute dtype)
    p_ref: (E, 3)      f32 columns = [conv bias, LN gamma, LN beta]
    o_ref: (1, E, tl)  output block, tokens on the lane axis
    """
    x = x_ref[0]                       # (tl, K)
    w = w_ref[...]                     # (E, K)
    # Y^T = W @ X^T ("NT" contraction) -> (E, tl), f32 accumulation on the MXU.
    y = lax.dot_general(w, x, (((1,), (1,)), ((), ())),
                        preferred_element_type=jnp.float32)
    y = y + p_ref[:, 0:1]              # conv bias, broadcast over lanes
    if use_norm:
        # LayerNorm over embed_dim (sublane axis 0 of (E, tl)); f32 math,
        # biased variance + eps inside rsqrt, matching torch.nn.LayerNorm.
        mean = jnp.mean(y, axis=0, keepdims=True)
        var = jnp.mean((y - mean) * (y - mean), axis=0, keepdims=True)
        y = (y - mean) * lax.rsqrt(var + eps)
        y = y * p_ref[:, 1:2] + p_ref[:, 2:3]
    o_ref[0] = y.astype(o_ref.dtype)


def _vmem_budget_bytes():
    """Generation-aware VMEM budget.

    v7x has only 64 MiB/TC, so the default (also used when detection fails) is
    a conservative ~44 MiB; v5e/v6e (128 MiB physical) can afford ~96 MiB.
    """
    kind = ""
    try:
        kind = jax.devices()[0].device_kind.lower()
    except Exception:
        pass
    if "v7" in kind:
        return 44 * 1024 * 1024
    if ("v5" in kind) or ("v6" in kind):
        return 96 * 1024 * 1024
    return 44 * 1024 * 1024  # unknown -> safe on every generation


def _choose_token_tile(L, K, E, B, *, in_itemsize, out_itemsize, vmem_budget,
                       min_steps=2, max_tile=4096):
    """Pick the token-tile size tl (always a multiple of 128) and padded L.

    tl is sized so that the double-buffered x/out pipeline tiles, the f32 LN
    temporaries and the weight's 2x pipeline footprint fit `vmem_budget`;
    it is then shrunk (if needed) so the grid has >= `min_steps` total steps
    (v7x megacore needs >= 2 to feed both TensorCores).
    """
    # Per-token bytes: 2x buffered x tile + 2x buffered out tile + ~3 f32
    # (E, tl) temporaries (y, centered, normalized) live in the body.
    per_tok = 2 * K * in_itemsize + 2 * E * out_itemsize + 3 * E * 4
    # Fixed bytes: 2x buffered weight block + tiny params block.
    fixed = 2 * E * K * in_itemsize + 2 * E * 3 * 4
    avail = max(vmem_budget - fixed, 128 * per_tok)
    tl = int(avail // per_tok)
    tl = max(128, (tl // 128) * 128)
    tl = min(tl, max_tile)

    L128 = 128 * ((L + 127) // 128)       # lane-dense minimum padding
    tl = min(tl, L128)

    def total_steps(t):
        return B * ((L128 + t - 1) // t)

    while tl > 128 and total_steps(tl) < min_steps:
        tl = max(128, ((tl // 128) // 2) * 128)

    L_pad = tl * ((L + tl - 1) // tl)
    return tl, L_pad


def patch_embed_forward(x, conv_w, conv_b, ln_w, ln_b,
                        patch_size=(4, 4, 4), use_norm=False, eps=1e-5,
                        compute_dtype=jnp.bfloat16, out_dtype=None):
    """x: (B, C, H, W, T) (PyTorch NCDHW-style layout).
    conv_w: (E, C, pH, pW, pT), conv_b: (E,), ln_w/ln_b: (E,).
    Returns (B, E, nH, nW, nT), matching the PyTorch module."""
    pH, pW, pT = patch_size
    B, C, H, W, T = x.shape
    E = conv_w.shape[0]
    if out_dtype is None:
        # Keep module semantics (output dtype == input dtype). Passing
        # out_dtype=compute_dtype halves the output HBM stream if the
        # downstream consumer accepts it.
        out_dtype = x.dtype

    # Cast to the compute dtype BEFORE padding/relayout so every wrapper-side
    # HBM pass moves 2-byte elements; the MXU still accumulates in f32.
    xc = x.astype(compute_dtype)

    # --- pad spatial dims to multiples of the patch size (same as nnf.pad) ---
    pad_h, pad_w, pad_t = (-H) % pH, (-W) % pW, (-T) % pT
    if pad_h or pad_w or pad_t:
        xc = jnp.pad(xc, ((0, 0), (0, 0), (0, pad_h), (0, pad_w), (0, pad_t)))
        H, W, T = H + pad_h, W + pad_w, T + pad_t
    nH, nW, nT = H // pH, W // pW, T // pT
    L = nH * nW * nT                 # tokens per batch
    K = C * pH * pW * pT             # patch feature size

    in_itemsize = jnp.dtype(compute_dtype).itemsize
    out_itemsize = jnp.dtype(out_dtype).itemsize
    vmem_budget = _vmem_budget_bytes()
    tl, L_pad = _choose_token_tile(L, K, E, B,
                                   in_itemsize=in_itemsize,
                                   out_itemsize=out_itemsize,
                                   vmem_budget=vmem_budget)

    # --- patchify relayout: (B,C,H,W,T) -> (B, L_pad, K), token-major, with
    # feature order (c, ph, pw, pt) matching the flattened conv weight.
    # allow_input_fusion below lets XLA fold this whole producer chain into
    # the kernel's input DMA when the wrapper runs under jit.
    xp = xc.reshape(B, C, nH, pH, nW, pW, nT, pT)
    xp = jnp.transpose(xp, (0, 2, 4, 6, 1, 3, 5, 7))   # (B,nH,nW,nT,C,pH,pW,pT)
    xb = xp.reshape(B, L, K)
    if L_pad != L:
        # TODO(synk): a clamped-overlap Element index_map on the last token
        # tile would avoid this pad and the output slice entirely.
        xb = jnp.pad(xb, ((0, 0), (0, L_pad - L), (0, 0)))

    # Conv3d weight (E, C, pH, pW, pT) -> (E, K); feature order already matches
    # xb, so no weight transpose is needed.
    wm = conv_w.reshape(E, K).astype(compute_dtype)
    # Merge bias / gamma / beta into one small f32 operand: (E, 3).
    params = jnp.stack([conv_b, ln_w, ln_b], axis=1).astype(jnp.float32)

    grid = (B, L_pad // tl)
    kernel = functools.partial(_patch_embed_kernel,
                               use_norm=use_norm, eps=float(eps))

    cost = pl.CostEstimate(
        flops=2 * B * L_pad * K * E,
        transcendentals=(B * L_pad) if use_norm else 0,
        bytes_accessed=(B * L_pad * K * in_itemsize + E * K * in_itemsize
                        + B * E * L_pad * out_itemsize))

    y = pl.pallas_call(
        kernel,
        out_shape=jax.ShapeDtypeStruct((B, E, L_pad), out_dtype),
        grid_spec=pltpu.PrefetchScalarGridSpec(
            num_scalar_prefetch=0,
            grid=grid,
            in_specs=[
                pl.BlockSpec((1, tl, K), lambda b, j: (b, j, 0)),
                pl.BlockSpec((E, K), lambda b, j: (0, 0)),
                pl.BlockSpec((E, 3), lambda b, j: (0, 0)),
            ],
            out_specs=pl.BlockSpec((1, E, tl), lambda b, j: (b, 0, j)),
        ),
        compiler_params=pltpu.CompilerParams(
            dimension_semantics=("parallel", "parallel"),
            vmem_limit_bytes=int(vmem_budget),
            allow_input_fusion=[True, False, False]),
        cost_estimate=cost,
    )(xb, wm, params)

    if L_pad != L:
        y = y[:, :, :L]
    # Pure reshape — no output transpose pass.
    return y.reshape(B, E, nH, nW, nT)


def _reference(x, conv_w, conv_b, ln_w, ln_b, patch_size, use_norm,
               eps=1e-5, compute_dtype=jnp.float32):
    """Pure-JAX reference (strided conv3d via dot, same patch math).
    Inputs are rounded through `compute_dtype` to match the kernel's cast."""
    pH, pW, pT = patch_size
    B, C, H, W, T = x.shape
    E = conv_w.shape[0]
    x = jnp.pad(x, ((0, 0), (0, 0),
                    (0, (-H) % pH), (0, (-W) % pW), (0, (-T) % pT)))
    _, _, H, W, T = x.shape
    nH, nW, nT = H // pH, W // pW, T // pT
    xr = x.astype(compute_dtype).astype(jnp.float32)
    wr = conv_w.astype(compute_dtype).astype(jnp.float32)
    xp = xr.reshape(B, C, nH, pH, nW, pW, nT, pT)
    xp = jnp.transpose(xp, (0, 2, 4, 6, 1, 3, 5, 7)).reshape(-1, C * pH * pW * pT)
    y = xp @ wr.reshape(E, -1).T + conv_b
    if use_norm:
        mu = y.mean(-1, keepdims=True)
        var = ((y - mu) ** 2).mean(-1, keepdims=True)
        y = (y - mu) / jnp.sqrt(var + eps) * ln_w + ln_b
    return jnp.transpose(y.reshape(B, nH, nW, nT, E), (0, 4, 1, 2, 3))


if __name__ == "__main__":
    # Small shapes consistent with the module: patch_size=4, in_chans=4,
    # embed_dim=32. T=14 exercises the patch-size padding branch of forward().
    B, C, H, W, T = 2, 4, 16, 16, 14
    patch_size = (4, 4, 4)
    E = 32
    use_norm = True   # exercise the norm_layer=LayerNorm branch

    key = jax.random.PRNGKey(0)
    k_x, k_w, k_b, k_g, k_beta = jax.random.split(key, 5)
    x = jax.random.normal(k_x, (B, C, H, W, T), dtype=jnp.float32)
    conv_w = 0.05 * jax.random.normal(k_w, (E, C, *patch_size), dtype=jnp.float32)
    conv_b = 0.01 * jax.random.normal(k_b, (E,), dtype=jnp.float32)
    ln_w = 1.0 + 0.1 * jax.random.normal(k_g, (E,), dtype=jnp.float32)
    ln_b = 0.1 * jax.random.normal(k_beta, (E,), dtype=jnp.float32)

    # jit the wrapper so XLA can fuse the patchify relayout into the kernel's
    # input DMA (allow_input_fusion) instead of materializing it in HBM.
    fwd = jax.jit(functools.partial(patch_embed_forward,
                                    patch_size=patch_size, use_norm=use_norm))
    out = fwd(x, conv_w, conv_b, ln_w, ln_b)
    out = jax.block_until_ready(out)

    ref = _reference(x, conv_w, conv_b, ln_w, ln_b, patch_size, use_norm,
                     compute_dtype=jnp.bfloat16)
    nH, nW, nT = -(-H // 4), -(-W // 4), -(-T // 4)
    assert out.shape == (B, E, nH, nW, nT), out.shape
    err = float(jnp.max(jnp.abs(out - ref)))
    assert err < 1e-3, err
    print("KERNEL_OK")
</pallas_src>

<mosaic_0001>
module attributes {stable_mosaic.version = 11 : i64} {
  func.func @_patch_embed_kernel(%arg0: i32, %arg1: i32, %arg2: memref<1x128x256xbf16, #tpu.memory_space<vmem>>, %arg3: memref<32x256xbf16, #tpu.memory_space<vmem>>, %arg4: memref<32x3xf32, #tpu.memory_space<vmem>>, %arg5: memref<1x32x128xf32, #tpu.memory_space<vmem>>) attributes {dimension_semantics = [#tpu.dimension_semantics<parallel>, #tpu.dimension_semantics<parallel>], iteration_bounds = array<i64: 2, 1>, scalar_prefetch = 0 : i64, scratch_operands = 0 : i64, tpu.core_type = #tpu.core_type<tc>, window_params = [{transform_indices = @transform_0, window_bounds = array<i64: 1, 128, 256>}, {pipeline_mode = #tpu.pipeline_mode<synchronous>, transform_indices = @transform_1, window_bounds = array<i64: 32, 256>}, {pipeline_mode = #tpu.pipeline_mode<synchronous>, transform_indices = @transform_2, window_bounds = array<i64: 32, 3>}, {transform_indices = @transform_3, window_bounds = array<i64: 1, 32, 128>}]} {
    %c0 = arith.constant 0 : index
    %c0_0 = arith.constant 0 : index
    %c0_1 = arith.constant 0 : index
    %0 = vector.load %arg2[%c0, %c0_0, %c0_1] : memref<1x128x256xbf16, #tpu.memory_space<vmem>>, vector<1x128x256xbf16>
    %1 = vector.shape_cast %0 : vector<1x128x256xbf16> to vector<128x256xbf16>
    %c0_2 = arith.constant 0 : index
    %c0_3 = arith.constant 0 : index
    %2 = vector.load %arg3[%c0_2, %c0_3] : memref<32x256xbf16, #tpu.memory_space<vmem>>, vector<32x256xbf16>
    %cst = arith.constant dense<0.000000e+00> : vector<32x128xf32>
    %3 = tpu.matmul %2, %1, %cst {dimension_numbers = #tpu.dot_dimension_numbers<[1], [1], [0], [0], [0, 0, 1, 0], [], []>} : vector<32x256xbf16>, vector<128x256xbf16>, vector<32x128xf32> -> vector<32x128xf32>
    %c0_4 = arith.constant 0 : index
    %c0_5 = arith.constant 0 : index
    %4 = vector.load %arg4[%c0_4, %c0_5] : memref<32x3xf32, #tpu.memory_space<vmem>>, vector<32x1xf32>
    %5 = vector.broadcast %4 : vector<32x1xf32> to vector<32x128xf32>
    %6 = arith.addf %3, %5 : vector<32x128xf32>
    %cst_6 = arith.constant dense<0.000000e+00> : vector<128xf32>
    %7 = vector.multi_reduction <add>, %6, %cst_6 [0] : vector<32x128xf32> to vector<128xf32>
    %8 = vector.shape_cast %7 : vector<128xf32> to vector<1x128xf32>
    %cst_7 = arith.constant 3.200000e+01 : f32
    %9 = vector.broadcast %cst_7 : f32 to vector<1x128xf32>
    %10 = arith.divf %8, %9 : vector<1x128xf32>
    %11 = vector.broadcast %10 : vector<1x128xf32> to vector<32x128xf32>
    %12 = arith.subf %6, %11 : vector<32x128xf32>
    %13 = vector.broadcast %10 : vector<1x128xf32> to vector<32x128xf32>
    %14 = arith.subf %6, %13 : vector<32x128xf32>
    %15 = arith.mulf %12, %14 : vector<32x128xf32>
    %cst_8 = arith.constant dense<0.000000e+00> : vector<128xf32>
    %16 = vector.multi_reduction <add>, %15, %cst_8 [0] : vector<32x128xf32> to vector<128xf32>
    %17 = vector.shape_cast %16 : vector<128xf32> to vector<1x128xf32>
    %cst_9 = arith.constant 3.200000e+01 : f32
    %18 = vector.broadcast %cst_9 : f32 to vector<1x128xf32>
    %19 = arith.divf %17, %18 : vector<1x128xf32>
    %20 = vector.broadcast %10 : vector<1x128xf32> to vector<32x128xf32>
    %21 = arith.subf %6, %20 : vector<32x128xf32>
    %cst_10 = arith.constant 9.99999974E-6 : f32
    %22 = vector.broadcast %cst_10 : f32 to vector<1x128xf32>
    %23 = arith.addf %19, %22 : vector<1x128xf32>
    %24 = math.rsqrt %23 : vector<1x128xf32>
    %25 = vector.broadcast %24 : vector<1x128xf32> to vector<32x128xf32>
    %26 = arith.mulf %21, %25 : vector<32x128xf32>
    %c0_11 = arith.constant 0 : index
    %c1 = arith.constant 1 : index
    %27 = vector.load %arg4[%c0_11, %c1] : memref<32x3xf32, #tpu.memory_space<vmem>>, vector<32x1xf32>
    %28 = vector.broadcast %27 : vector<32x1xf32> to vector<32x128xf32>
    %29 = arith.mulf %26, %28 : vector<32x128xf32>
    %c0_12 = arith.constant 0 : index
    %c2 = arith.constant 2 : index
    %30 = vector.load %arg4[%c0_12, %c2] : memref<32x3xf32, #tpu.memory_space<vmem>>, vector<32x1xf32>
    %31 = vector.broadcast %30 : vector<32x1xf32> to vector<32x128xf32>
    %32 = arith.addf %29, %31 : vector<32x128xf32>
    %c0_13 = arith.constant 0 : index
    %c0_14 = arith.constant 0 : index
    %c0_15 = arith.constant 0 : index
    %33 = vector.load %arg5[%c0_13, %c0_14, %c0_15] : memref<1x32x128xf32, #tpu.memory_space<vmem>>, vector<1x32x128xf32>
    %34 = vector.shape_cast %33 : vector<1x32x128xf32> to vector<32x128xf32>
    %35 = vector.shape_cast %32 : vector<32x128xf32> to vector<1x32x128xf32>
    tpu.vector_store %arg5[%c0_13, %c0_14, %c0_15], %35 {strides = array<i32>} : memref<1x32x128xf32, #tpu.memory_space<vmem>>, vector<1x32x128xf32>,
    return
  }
  func.func @transform_0(%arg0: i32, %arg1: i32) -> (i32, i32, i32) {
    %c0_i32 = arith.constant 0 : i32
    %c0_i32_0 = arith.constant 0 : i32
    return %arg0, %arg1, %c0_i32 : i32, i32, i32
  }
  func.func @transform_1(%arg0: i32, %arg1: i32) -> (i32, i32) {
    %c0_i32 = arith.constant 0 : i32
    %c0_i32_0 = arith.constant 0 : i32
    %c0_i32_1 = arith.constant 0 : i32
    return %c0_i32, %c0_i32_0 : i32, i32
  }
  func.func @transform_2(%arg0: i32, %arg1: i32) -> (i32, i32) {
    %c0_i32 = arith.constant 0 : i32
    %c0_i32_0 = arith.constant 0 : i32
    %c0_i32_1 = arith.constant 0 : i32
    return %c0_i32, %c0_i32_0 : i32, i32
  }
  func.func @transform_3(%arg0: i32, %arg1: i32) -> (i32, i32, i32) {
    %c0_i32 = arith.constant 0 : i32
    %c0_i32_0 = arith.constant 0 : i32
    return %arg0, %c0_i32, %arg1 : i32, i32, i32
  }
}

</mosaic_0001>

<llo_original>
// kernel: patch_embed_forward.2
$region0: #{patch_embed_forward.2}
  #allocation0 [shape = 'u32[]', space=smem, size = 0x4, offset = 0x4, fixed_abs, tag = 'smem constant byte address 0x4 - core index']
  #allocation1 [shape = 'u32[144,128]{1,0:T(1,128)}', space=vmem, size = 0x12000, scoped, tag = 'internal scratch']
  #allocation2 [shape = 'u32[2048]{0}', space=vmem, size = 0x2000, scoped, tag = 'scoped memory for patch_embed_forward.2']
  #allocation3 [shape = 'u32[2048]{0}', space=vmem, size = 0x2000, scoped, tag = 'scoped memory for patch_embed_forward.2']
  #allocation4 [shape = 'u32[2048]{0}', space=vmem, size = 0x2000, scoped, tag = 'scoped memory for patch_embed_forward.2']
  #allocation5 [shape = 'u32[2048]{0}', space=vmem, size = 0x2000, scoped, tag = 'scoped memory for patch_embed_forward.2']
  #allocation6 [shape = 'u32[2048]{0}', space=vmem, size = 0x2000, scoped, tag = 'scoped memory for patch_embed_forward.2']
  %s0 = inlined_call_operand.vmem [shape: bf16[32,256], index: 0, kind: input, shape index: {}]
  %s1 = inlined_call_operand.vmem [shape: f32[32,3], index: 1, kind: input, shape index: {}]
  %s2 = inlined_call_operand.vmem [shape: bf16[2,64,256], index: 2, kind: input, shape index: {}]
  %s3 = inlined_call_operand.<no memory space> [shape: bf16[], index: 3, kind: input, shape index: {}]
  %s4 = inlined_call_operand.vmem [shape: f32[2,32,128], index: 4, kind: output, shape index: {}]
  %s5 = sld [smem:[#allocation0]]
  $region45: #{patch_embed_forward.2} parent=0
    _
  %s7 = ssub.s32 1, %s5
  %s8 = scalar_select 0, %s7, %s5
  %v9 = vstv %s3
  %v10 = vunpack.i.l.bf16 %v9
  %v12 = vunpack.i.h.bf16 %v9
  loop: start=0, step=1, limit=4
  $region2: #{patch_embed_forward.2} parent=0 // loop_pre_header
    _
  $region3: #{patch_embed_forward.2} parent=0 // loop_header
    %s15 = sphi 0, %s19
    %p16 = scmp.ge.s32.totalorder %s15, 4
    %s22 = sphi 0, %s34
    %s23 = sphi 0, %s30
    %s24 = sphi 0, %s22
    %s25 = sphi 0, %s23
    %s26 = sphi 0, %s24
    %s27 = sphi 0, %s25
    %s39 = sphi 0, %s41
    %s42 = sphi 0, %s39
    %s43 = sphi 0, %s42
    %s59 = sphi 0, %s43
    %s63 = sphi 0, %s63
    %s65 = sphi 0, %s63
    %s66 = sphi 0, %s65
    %s80 = sphi 0, %s66
    %s84 = sphi 0, %s84
    %s86 = sphi 0, %s84
    %s87 = sphi 0, %s86
    %s101 = sphi 0, %s87
    %s109 = sphi 0, %s111
    %s112 = sphi 0, %s109
    %s113 = sphi 0, %s112
    %s129 = sphi 0, %s113
  $region4: #{patch_embed_forward.2} parent=0 // loop_header_branch
    %18 = sbr.rel (%p16) target = $region8
  $region5: #{patch_embed_forward.2} parent=0 // loop_body
    %s20 = ssub.s32 %s15, 1
    %s21 = ssub.s32 %s15, 2
    %s28 = sadd.s32 1, %s23
    %p29 = scmp.ge.s32.totalorder %s28, 1
    %s30 = scalar_select %p29, 0, %s28
    %s31 = sadd.s32 1, %s22
    %s32 = scalar_select %p29, %s31, %s22
    %p33 = scmp.ge.s32.totalorder %s32, 2
    %s34 = scalar_select %p33, 0, %s32
    %s35 = ssub.s32 %s22, %s34
    %s36 = ssub.s32 %s23, %s30
    %s37 = sor.u32 %s35, %s36
    %p38 = scmp.eq.s32.totalorder %s37, 0
    %s40 = sadd.s32 %s39, 1
    %s41 = scalar_select %p38, %s39, %s40
    %p44 = pneg %p38
    %p45 = scmp.eq.s32.totalorder %s15, 1
    %p46 = por %p44, %p45
    %p47 = scmp.ne.s32.totalorder %s39, %s42
    %p48 = scmp.eq.s32.totalorder %s15, 0
    %p49 = por %p47, %p48
    %p50 = scmp.ne.s32.totalorder %s39, %s42
    %p51 = scmp.eq.s32.totalorder %s20, 1
    %p52 = por %p50, %p51
    %p53 = scmp.ne.s32.totalorder %s42, %s43
    %p54 = scmp.eq.s32.totalorder %s20, 0
    %p55 = por %p53, %p54
    %p56 = scmp.ne.s32.totalorder %s42, %s43
    %p57 = scmp.eq.s32.totalorder %s21, 1
    %p58 = por %p56, %p57
    %p60 = scmp.ne.s32.totalorder %s43, %s59
    %p61 = scmp.eq.s32.totalorder %s21, 0
    %p62 = por %p60, %p61
    %s64 = sadd.s32 %s63, 1
    %p67 = scmp.eq.s32.totalorder %s15, 1
    %p68 = scmp.ne.s32.totalorder %s63, %s65
    %p69 = scmp.eq.s32.totalorder %s15, 0
    %p70 = por %p68, %p69
    %p71 = scmp.ne.s32.totalorder %s63, %s65
    %p72 = scmp.eq.s32.totalorder %s20, 1
    %p73 = por %p71, %p72
    %p74 = scmp.ne.s32.totalorder %s65, %s66
    %p75 = scmp.eq.s32.totalorder %s20, 0
    %p76 = por %p74, %p75
    %p77 = scmp.ne.s32.totalorder %s65, %s66
    %p78 = scmp.eq.s32.totalorder %s21, 1
    %p79 = por %p77, %p78
    %p81 = scmp.ne.s32.totalorder %s66, %s80
    %p82 = scmp.eq.s32.totalorder %s21, 0
    %p83 = por %p81, %p82
    %s85 = sadd.s32 %s84, 1
    %p88 = scmp.eq.s32.totalorder %s15, 1
    %p89 = scmp.ne.s32.totalorder %s84, %s86
    %p90 = scmp.eq.s32.totalorder %s15, 0
    %p91 = por %p89, %p90
    %p92 = scmp.ne.s32.totalorder %s84, %s86
    %p93 = scmp.eq.s32.totalorder %s20, 1
    %p94 = por %p92, %p93
    %p95 = scmp.ne.s32.totalorder %s86, %s87
    %p96 = scmp.eq.s32.totalorder %s20, 0
    %p97 = por %p95, %p96
    %p98 = scmp.ne.s32.totalorder %s86, %s87
    %p99 = scmp.eq.s32.totalorder %s21, 1
    %p100 = por %p98, %p99
    %p102 = scmp.ne.s32.totalorder %s87, %s101
    %p103 = scmp.eq.s32.totalorder %s21, 0
    %p104 = por %p102, %p103
    %s105 = ssub.s32 %s22, %s34
    %s106 = ssub.s32 %s23, %s30
    %s107 = sor.u32 %s105, %s106
    %p108 = scmp.eq.s32.totalorder %s107, 0
    %s110 = sadd.s32 %s109, 1
    %s111 = scalar_select %p108, %s109, %s110
    %p114 = pneg %p108
    %p115 = scmp.eq.s32.totalorder %s15, 1
    %p116 = por %p114, %p115
    %p117 = scmp.ne.s32.totalorder %s109, %s112
    %p118 = scmp.eq.s32.totalorder %s15, 0
    %p119 = por %p117, %p118
    %p120 = scmp.ne.s32.totalorder %s109, %s112
    %p121 = scmp.eq.s32.totalorder %s20, 1
    %p122 = por %p120, %p121
    %p123 = scmp.ne.s32.totalorder %s112, %s113
    %p124 = scmp.eq.s32.totalorder %s20, 0
    %p125 = por %p123, %p124
    %p126 = scmp.ne.s32.totalorder %s112, %s113
    %p127 = scmp.eq.s32.totalorder %s21, 1
    %p128 = por %p126, %p127
    %p130 = scmp.ne.s32.totalorder %s113, %s129
    %p131 = scmp.eq.s32.totalorder %s21, 0
    %p132 = por %p130, %p131
    %p133 = scmp.le.s32.totalorder 1, %s15
    %p134 = scmp.lt.s32.totalorder %s15, 3
    %p135 = pnand %p133, %p134
    %p136 = pneg %p135
    // Predicated region
    $region9: #{patch_embed_forward.2} parent=5 // pred_check
      _
    $region10: #{patch_embed_forward.2} parent=5 // pred_check_branch
      %138 = sbr.rel (%p135) target = $region12
    $region11: #{patch_embed_forward.2} parent=5 // pred_region
      %s139 = ssub.s32 %s15, 1
      // Predicated region
      $region13: #{patch_embed_forward.2} parent=11 // pred_check
        %p140 = pneg %p76
      $region14: #{patch_embed_forward.2} parent=11 // pred_check_branch
        %142 = sbr.rel (%p140) target = $region16
      $region15: #{patch_embed_forward.2} parent=11 // pred_region
        _
      $region16: #{patch_embed_forward.2} parent=11 // pred_fallthru
        _
      // Predicated region
      $region17: #{patch_embed_forward.2} parent=11 // pred_check
        %p143 = pneg %p97
      $region18: #{patch_embed_forward.2} parent=11 // pred_check_branch
        %145 = sbr.rel (%p143) target = $region20
      $region19: #{patch_embed_forward.2} parent=11 // pred_region
        _
      $region20: #{patch_embed_forward.2} parent=11 // pred_fallthru
        _
    $region12: #{patch_embed_forward.2} parent=5 // pred_fallthru
      _
    %p146 = scmp.lt.s32.totalorder %s15, 2
    // Predicated region
    $region21: #{patch_embed_forward.2} parent=5 // pred_check
      %p147 = pneg %p146
    $region22: #{patch_embed_forward.2} parent=5 // pred_check_branch
      %149 = sbr.rel (%p147) target = $region24
    $region23: #{patch_embed_forward.2} parent=5 // pred_region
      // Predicated region
      $region25: #{patch_embed_forward.2} parent=23 // pred_check
        %p150 = pneg %p49
      $region26: #{patch_embed_forward.2} parent=23 // pred_check_branch
        %152 = sbr.rel (%p150) target = $region28
      $region27: #{patch_embed_forward.2} parent=23 // pred_region
        %s153 = smul.u32 16, %s23
        %s154 = ssub.s32 8, %s153
        %s155 = smul.u32 64, %s154
        %s156 = smul.u32 %s155, 2
        %p157 = scmp.lt.s32.totalorder %s22, 1
        %s158 = scalar_select %p157, %s22, 1
        %p159 = scmp.lt.s32.totalorder %s153, 7
        %s160 = scalar_select %p159, %s153, 7
        %s161 = smul.addr %s160, 2
        %s162 = smul.addr %s158, 16
        %s163 = sadd.s32 %s161, %s162
        %s164 = smul.addr %s163, 4
        %s165 = scalar_lea.vmem %s2, %s164
        %s166 = smul.u32 16, %s23
        %s167 = ssub.s32 8, %s166
        %s168 = smul.u32 64, %s167
        %s169 = smul.u32 %s168, 2
      $region28: #{patch_embed_forward.2} parent=23 // pred_fallthru
        _
    $region24: #{patch_embed_forward.2} parent=5 // pred_fallthru
      _
    %p170 = scmp.le.s32.totalorder 1, %s15
    %p171 = scmp.lt.s32.totalorder %s15, 3
    %p172 = pnand %p170, %p171
    %p173 = pneg %p172
    // Predicated region
    $region29: #{patch_embed_forward.2} parent=5 // pred_check
      _
    $region30: #{patch_embed_forward.2} parent=5 // pred_check_branch
      %175 = sbr.rel (%p172) target = $region32
    $region31: #{patch_embed_forward.2} parent=5 // pred_region
      #allocation7 [shape = 'u8[65536]{0}', space=vmem, size = 0x10000, dematerialized = true, scoped, tag = 'FusionAdapter Buffer %fusion.1 = bf16[2,128,256]{2,1,0:T(8,128)(2,1)} fusion(%param_2.1, %param_3), kind=kLoop, calls=%fused_computation.1.clone, metadata={op_name="jit(patch_embed_forward)/jit(_pad)/pad" stack_frame_id=12}']
      %s176 = ssub.s32 %s15, 1
      %s177 = smul.u32 16, %s25
      %s178 = ssub.s32 8, %s177
      %s179 = smul.u32 64, %s178
      %s180 = smul.u32 %s179, 2
      %p181 = scmp.lt.s32.totalorder %s24, 1
      %s182 = scalar_select %p181, %s24, 1
      %p183 = scmp.lt.s32.totalorder %s177, 7
      %s184 = scalar_select %p183, %s177, 7
      %s185 = smul.addr %s184, 2
      %s186 = smul.addr %s182, 16
      %s187 = sadd.s32 %s185, %s186
      %s188 = smul.addr %s187, 4
      %s189 = scalar_lea.vmem %s2, %s188
      %p190 = pneg %p55
      %p191 = pneg %p52
      %p192 = pneg %p76
      %p193 = pneg %p73
      %p194 = pneg %p97
      %p195 = pneg %p94
      %p196 = pneg %p125
      %p197 = pneg %p122
      %p198 = scmp.lt.s32.totalorder %s24, 1
      %s199 = scalar_select %p198, %s24, 1
      %p200 = scmp.lt.s32.totalorder %s25, 0
      %s201 = scalar_select %p200, %s25, 0
      %s202 = smul.addr %s199, 4
      %s203 = sadd.s32 %s201, %s202
      %s204 = smul.addr %s203, 8
      %s205 = scalar_lea.vmem %s4, %s204
      %s206 = smul.u32 16, %s25
      %s207 = ssub.s32 8, %s206
      %s208 = smul.u32 64, %s207
      %s209 = smul.u32 %s208, 2
      %p210 = scmp.lt.s32.totalorder %s24, 1
      %s211 = scalar_select %p210, %s24, 1
      %p212 = scmp.lt.s32.totalorder %s206, 7
      %s213 = scalar_select %p212, %s206, 7
      %s214 = smul.addr %s213, 2
      %s215 = smul.addr %s211, 16
      %s216 = sadd.s32 %s214, %s215
      %s217 = smul.addr %s216, 4
      %s218 = scalar_lea.vmem %s2, %s217
      %s219 = smul.u32 16, %s25
      %s220 = ssub.s32 8, %s219
      %s221 = smul.u32 64, %s220
      %s222 = smul.u32 %s221, 2
      %p223 = scmp.lt.s32.totalorder %s24, 1
      %s224 = scalar_select %p223, %s24, 1
      %p225 = scmp.lt.s32.totalorder %s25, 0
      %s226 = scalar_select %p225, %s25, 0
      %s227 = smul.addr %s224, 4
      %s228 = sadd.s32 %s226, %s227
      %s229 = smul.addr %s228, 8
      %s230 = scalar_lea.vmem %s4, %s229
      %s231 = ssub.s32 7, %s219
      %p232 = scmp.lt.s32.totalorder %s231, 0
      %s233 = scalar_select %p232, 0, 255
      %s234 = sshrl.u32 %s233, 1
      %s235 = sor.u32 %s233, %s234
      %s236 = sand.u32 %s235, 85
      %s237 = sshrl.u32 %s236, 1
      %s238 = sor.u32 %s236, %s237
      %s239 = sand.u32 51, %s238
      %s240 = sshrl.u32 %s239, 2
      %s241 = sor.u32 %s239, %s240
      %s242 = sand.u32 15, %s241
      %v243 = vld [vmem:[%s218] sm:%s242]
      %v244 = vunpack.c.l.bf16 %v243
      %v245 = vunpack.c.h.bf16 %v243
      %s246 = ssub.s32 7, %s219
      %v247 = vstv %s246
      %vm248 = vcmp.lt.s32.totalorder %v247, 0
      %v249 = vsel %vm248, %v10, %v244
      %v250 = vpack.c.bf16 0.0, %v249
      %252 = vst [vmem:[#allocation7] sm:$0xf] %v250
      %s253 = scalar_lea.vmem %s218, 4
      %s254 = ssub.s32 7, %s219
      %p255 = scmp.lt.s32.totalorder %s254, 0
      %s256 = scalar_select %p255, 0, 255
      %s257 = sshrl.u32 %s256, 1
      %s258 = sor.u32 %s256, %s257
      %s259 = sand.u32 %s258, 85
      %s260 = sshrl.u32 %s259, 1
      %s261 = sor.u32 %s259, %s260
      %s262 = sand.u32 51, %s261
      %s263 = sshrl.u32 %s262, 2
      %s264 = sor.u32 %s262, %s263
      %s265 = sand.u32 15, %s264
      %v266 = vld [vmem:[%s253] sm:%s265]
      %v267 = vunpack.c.l.bf16 %v266
      %v268 = vunpack.c.h.bf16 %v266
      %s269 = ssub.s32 7, %s219
      %v270 = vstv %s269
      %vm271 = vcmp.lt.s32.totalorder %v270, 0
      %v272 = vsel %vm271, %v10, %v267
      %s273 = scalar_lea.vmem [#allocation7], 4
      %v274 = vpack.c.bf16 0.0, %v272
      %276 = vst [vmem:[%s273] sm:$0xf] %v274
      %s277 = scalar_lea.vmem %s218, 8
      %s278 = sadd.s32 %s219, 1
      %s279 = ssub.s32 7, %s278
      %p280 = scmp.lt.s32.totalorder %s279, 0
      %s281 = scalar_select %p280, 0, 255
      %s282 = sshrl.u32 %s281, 1
      %s283 = sor.u32 %s281, %s282
      %s284 = sand.u32 %s283, 85
      %s285 = sshrl.u32 %s284, 1
      %s286 = sor.u32 %s284, %s285
      %s287 = sand.u32 51, %s286
      %s288 = sshrl.u32 %s287, 2
      %s289 = sor.u32 %s287, %s288
      %s290 = sand.u32 15, %s289
      %v291 = vld [vmem:[%s277] sm:%s290]
      %v292 = vunpack.c.l.bf16 %v291
      %v293 = vunpack.c.h.bf16 %v291
      %s294 = sadd.s32 %s219, 1
      %s295 = ssub.s32 7, %s294
      %v296 = vstv %s295
      %vm297 = vcmp.lt.s32.totalorder %v296, 0
      %v298 = vsel %vm297, %v10, %v292
      %s299 = scalar_lea.vmem [#allocation7], 8
      %v300 = vpack.c.bf16 0.0, %v298
      %302 = vst [vmem:[%s299] sm:$0xf] %v300
      %s303 = scalar_lea.vmem %s218, 12
      %s304 = sadd.s32 %s219, 1
      %s305 = ssub.s32 7, %s304
      %p306 = scmp.lt.s32.totalorder %s305, 0
      %s307 = scalar_select %p306, 0, 255
      %s308 = sshrl.u32 %s307, 1
      %s309 = sor.u32 %s307, %s308
      %s310 = sand.u32 %s309, 85
      %s311 = sshrl.u32 %s310, 1
      %s312 = sor.u32 %s310, %s311
      %s313 = sand.u32 51, %s312
      %s314 = sshrl.u32 %s313, 2
      %s315 = sor.u32 %s313, %s314
      %s316 = sand.u32 15, %s315
      %v317 = vld [vmem:[%s303] sm:%s316]
      %v318 = vunpack.c.l.bf16 %v317
      %v319 = vunpack.c.h.bf16 %v317
      %s320 = sadd.s32 %s219, 1
      %s321 = ssub.s32 7, %s320
      %v322 = vstv %s321
      %vm323 = vcmp.lt.s32.totalorder %v322, 0
      %v324 = vsel %vm323, %v10, %v318
      %s325 = scalar_lea.vmem [#allocation7], 12
      %v326 = vpack.c.bf16 0.0, %v324
      %328 = vst [vmem:[%s325] sm:$0xf] %v326
      %s329 = scalar_lea.vmem %s218, 16
      %s330 = sadd.s32 %s219, 2
      %s331 = ssub.s32 7, %s330
      %p332 = scmp.lt.s32.totalorder %s331, 0
      %s333 = scalar_select %p332, 0, 255
      %s334 = sshrl.u32 %s333, 1
      %s335 = sor.u32 %s333, %s334
      %s336 = sand.u32 %s335, 85
      %s337 = sshrl.u32 %s336, 1
      %s338 = sor.u32 %s336, %s337
      %s339 = sand.u32 51, %s338
      %s340 = sshrl.u32 %s339, 2
      %s341 = sor.u32 %s339, %s340
      %s342 = sand.u32 15, %s341
      %v343 = vld [vmem:[%s329] sm:%s342]
      %v344 = vunpack.c.l.bf16 %v343
      %v345 = vunpack.c.h.bf16 %v343
      %s346 = sadd.s32 %s219, 2
      %s347 = ssub.s32 7, %s346
      %v348 = vstv %s347
      %vm349 = vcmp.lt.s32.totalorder %v348, 0
      %v350 = vsel %vm349, %v10, %v344
      %s351 = scalar_lea.vmem [#allocation7], 16
      %v352 = vpack.c.bf16 0.0, %v350
      %354 = vst [vmem:[%s351] sm:$0xf] %v352
      %s355 = scalar_lea.vmem %s218, 20
      %s356 = sadd.s32 %s219, 2
      %s357 = ssub.s32 7, %s356
      %p358 = scmp.lt.s32.totalorder %s357, 0
      %s359 = scalar_select %p358, 0, 255
      %s360 = sshrl.u32 %s359, 1
      %s361 = sor.u32 %s359, %s360
      %s362 = sand.u32 %s361, 85
      %s363 = sshrl.u32 %s362, 1
      %s364 = sor.u32 %s362, %s363
      %s365 = sand.u32 51, %s364
      %s366 = sshrl.u32 %s365, 2
      %s367 = sor.u32 %s365, %s366
      %s368 = sand.u32 15, %s367
      %v369 = vld [vmem:[%s355] sm:%s368]
      %v370 = vunpack.c.l.bf16 %v369
      %v371 = vunpack.c.h.bf16 %v369
      %s372 = sadd.s32 %s219, 2
      %s373 = ssub.s32 7, %s372
      %v374 = vstv %s373
      %vm375 = vcmp.lt.s32.totalorder %v374, 0
      %v376 = vsel %vm375, %v10, %v370
      %s377 = scalar_lea.vmem [#allocation7], 20
      %v378 = vpack.c.bf16 0.0, %v376
      %380 = vst [vmem:[%s377] sm:$0xf] %v378
      %s381 = scalar_lea.vmem %s218, 24
      %s382 = sadd.s32 %s219, 3
      %s383 = ssub.s32 7, %s382
      %p384 = scmp.lt.s32.totalorder %s383, 0
      %s385 = scalar_select %p384, 0, 255
      %s386 = sshrl.u32 %s385, 1
      %s387 = sor.u32 %s385, %s386
      %s388 = sand.u32 %s387, 85
      %s389 = sshrl.u32 %s388, 1
      %s390 = sor.u32 %s388, %s389
      %s391 = sand.u32 51, %s390
      %s392 = sshrl.u32 %s391, 2
      %s393 = sor.u32 %s391, %s392
      %s394 = sand.u32 15, %s393
      %v395 = vld [vmem:[%s381] sm:%s394]
      %v396 = vunpack.c.l.bf16 %v395
      %v397 = vunpack.c.h.bf16 %v395
      %s398 = sadd.s32 %s219, 3
      %s399 = ssub.s32 7, %s398
      %v400 = vstv %s399
      %vm401 = vcmp.lt.s32.totalorder %v400, 0
      %v402 = vsel %vm401, %v10, %v396
      %s403 = scalar_lea.vmem [#allocation7], 24
      %v404 = vpack.c.bf16 0.0, %v402
      %406 = vst [vmem:[%s403] sm:$0xf] %v404
      %s407 = scalar_lea.vmem %s218, 28
      %s408 = sadd.s32 %s219, 3
      %s409 = ssub.s32 7, %s408
      %p410 = scmp.lt.s32.totalorder %s409, 0
      %s411 = scalar_select %p410, 0, 255
      %s412 = sshrl.u32 %s411, 1
      %s413 = sor.u32 %s411, %s412
      %s414 = sand.u32 %s413, 85
      %s415 = sshrl.u32 %s414, 1
      %s416 = sor.u32 %s414, %s415
      %s417 = sand.u32 51, %s416
      %s418 = sshrl.u32 %s417, 2
      %s419 = sor.u32 %s417, %s418
      %s420 = sand.u32 15, %s419
      %v421 = vld [vmem:[%s407] sm:%s420]
      %v422 = vunpack.c.l.bf16 %v421
      %v423 = vunpack.c.h.bf16 %v421
      %s424 = sadd.s32 %s219, 3
      %s425 = ssub.s32 7, %s424
      %v426 = vstv %s425
      %vm427 = vcmp.lt.s32.totalorder %v426, 0
      %v428 = vsel %vm427, %v10, %v422
      %s429 = scalar_lea.vmem [#allocation7], 28
      %v430 = vpack.c.bf16 0.0, %v428
      %432 = vst [vmem:[%s429] sm:$0xf] %v430
      %s433 = scalar_lea.vmem %s218, 32
      %s434 = sadd.s32 %s219, 4
      %s435 = ssub.s32 7, %s434
      %p436 = scmp.lt.s32.totalorder %s435, 0
      %s437 = scalar_select %p436, 0, 255
      %s438 = sshrl.u32 %s437, 1
      %s439 = sor.u32 %s437, %s438
      %s440 = sand.u32 %s439, 85
      %s441 = sshrl.u32 %s440, 1
      %s442 = sor.u32 %s440, %s441
      %s443 = sand.u32 51, %s442
      %s444 = sshrl.u32 %s443, 2
      %s445 = sor.u32 %s443, %s444
      %s446 = sand.u32 15, %s445
      %v447 = vld [vmem:[%s433] sm:%s446]
      %v448 = vunpack.c.l.bf16 %v447
      %v449 = vunpack.c.h.bf16 %v447
      %s450 = sadd.s32 %s219, 4
      %s451 = ssub.s32 7, %s450
      %v452 = vstv %s451
      %vm453 = vcmp.lt.s32.totalorder %v452, 0
      %v454 = vsel %vm453, %v10, %v448
      %s455 = scalar_lea.vmem [#allocation7], 32
      %v456 = vpack.c.bf16 0.0, %v454
      %458 = vst [vmem:[%s455] sm:$0xf] %v456
      %s459 = scalar_lea.vmem %s218, 36
      %s460 = sadd.s32 %s219, 4
      %s461 = ssub.s32 7, %s460
      %p462 = scmp.lt.s32.totalorder %s461, 0
      %s463 = scalar_select %p462, 0, 255
      %s464 = sshrl.u32 %s463, 1
      %s465 = sor.u32 %s463, %s464
      %s466 = sand.u32 %s465, 85
      %s467 = sshrl.u32 %s466, 1
      %s468 = sor.u32 %s466, %s467
      %s469 = sand.u32 51, %s468
      %s470 = sshrl.u32 %s469, 2
      %s471 = sor.u32 %s469, %s470
      %s472 = sand.u32 15, %s471
      %v473 = vld [vmem:[%s459] sm:%s472]
      %v474 = vunpack.c.l.bf16 %v473
      %v475 = vunpack.c.h.bf16 %v473
      %s476 = sadd.s32 %s219, 4
      %s477 = ssub.s32 7, %s476
      %v478 = vstv %s477
      %vm479 = vcmp.lt.s32.totalorder %v478, 0
      %v480 = vsel %vm479, %v10, %v474
      %s481 = scalar_lea.vmem [#allocation7], 36
      %v482 = vpack.c.bf16 0.0, %v480
      %484 = vst [vmem:[%s481] sm:$0xf] %v482
      %s485 = scalar_lea.vmem %s218, 40
      %s486 = sadd.s32 %s219, 5
      %s487 = ssub.s32 7, %s486
      %p488 = scmp.lt.s32.totalorder %s487, 0
      %s489 = scalar_select %p488, 0, 255
      %s490 = sshrl.u32 %s489, 1
      %s491 = sor.u32 %s489, %s490
      %s492 = sand.u32 %s491, 85
      %s493 = sshrl.u32 %s492, 1
      %s494 = sor.u32 %s492, %s493
      %s495 = sand.u32 51, %s494
      %s496 = sshrl.u32 %s495, 2
      %s497 = sor.u32 %s495, %s496
      %s498 = sand.u32 15, %s497
      %v499 = vld [vmem:[%s485] sm:%s498]
      %v500 = vunpack.c.l.bf16 %v499
      %v501 = vunpack.c.h.bf16 %v499
      %s502 = sadd.s32 %s219, 5
      %s503 = ssub.s32 7, %s502
      %v504 = vstv %s503
      %vm505 = vcmp.lt.s32.totalorder %v504, 0
      %v506 = vsel %vm505, %v10, %v500
      %s507 = scalar_lea.vmem [#allocation7], 40
      %v508 = vpack.c.bf16 0.0, %v506
      %510 = vst [vmem:[%s507] sm:$0xf] %v508
      %s511 = scalar_lea.vmem %s218, 44
      %s512 = sadd.s32 %s219, 5
      %s513 = ssub.s32 7, %s512
      %p514 = scmp.lt.s32.totalorder %s513, 0
      %s515 = scalar_select %p514, 0, 255
      %s516 = sshrl.u32 %s515, 1
      %s517 = sor.u32 %s515, %s516
      %s518 = sand.u32 %s517, 85
      %s519 = sshrl.u32 %s518, 1
      %s520 = sor.u32 %s518, %s519
      %s521 = sand.u32 51, %s520
      %s522 = sshrl.u32 %s521, 2
      %s523 = sor.u32 %s521, %s522
      %s524 = sand.u32 15, %s523
      %v525 = vld [vmem:[%s511] sm:%s524]
      %v526 = vunpack.c.l.bf16 %v525
      %v527 = vunpack.c.h.bf16 %v525
      %s528 = sadd.s32 %s219, 5
      %s529 = ssub.s32 7, %s528
      %v530 = vstv %s529
      %vm531 = vcmp.lt.s32.totalorder %v530, 0
      %v532 = vsel %vm531, %v10, %v526
      %s533 = scalar_lea.vmem [#allocation7], 44
      %v534 = vpack.c.bf16 0.0, %v532
      %536 = vst [vmem:[%s533] sm:$0xf] %v534
      %s537 = scalar_lea.vmem %s218, 48
      %s538 = sadd.s32 %s219, 6
      %s539 = ssub.s32 7, %s538
      %p540 = scmp.lt.s32.totalorder %s539, 0
      %s541 = scalar_select %p540, 0, 255
      %s542 = sshrl.u32 %s541, 1
      %s543 = sor.u32 %s541, %s542
      %s544 = sand.u32 %s543, 85
      %s545 = sshrl.u32 %s544, 1
      %s546 = sor.u32 %s544, %s545
      %s547 = sand.u32 51, %s546
      %s548 = sshrl.u32 %s547, 2
      %s549 = sor.u32 %s547, %s548
      %s550 = sand.u32 15, %s549
      %v551 = vld [vmem:[%s537] sm:%s550]
      %v552 = vunpack.c.l.bf16 %v551
      %v553 = vunpack.c.h.bf16 %v551
      %s554 = sadd.s32 %s219, 6
      %s555 = ssub.s32 7, %s554
      %v556 = vstv %s555
      %vm557 = vcmp.lt.s32.totalorder %v556, 0
      %v558 = vsel %vm557, %v10, %v552
      %s559 = scalar_lea.vmem [#allocation7], 48
      %v560 = vpack.c.bf16 0.0, %v558
      %562 = vst [vmem:[%s559] sm:$0xf] %v560
      %s563 = scalar_lea.vmem %s218, 52
      %s564 = sadd.s32 %s219, 6
      %s565 = ssub.s32 7, %s564
      %p566 = scmp.lt.s32.totalorder %s565, 0
      %s567 = scalar_select %p566, 0, 255
      %s568 = sshrl.u32 %s567, 1
      %s569 = sor.u32 %s567, %s568
      %s570 = sand.u32 %s569, 85
      %s571 = sshrl.u32 %s570, 1
      %s572 = sor.u32 %s570, %s571
      %s573 = sand.u32 51, %s572
      %s574 = sshrl.u32 %s573, 2
      %s575 = sor.u32 %s573, %s574
      %s576 = sand.u32 15, %s575
      %v577 = vld [vmem:[%s563] sm:%s576]
      %v578 = vunpack.c.l.bf16 %v577
      %v579 = vunpack.c.h.bf16 %v577
      %s580 = sadd.s32 %s219, 6
      %s581 = ssub.s32 7, %s580
      %v582 = vstv %s581
      %vm583 = vcmp.lt.s32.totalorder %v582, 0
      %v584 = vsel %vm583, %v10, %v578
      %s585 = scalar_lea.vmem [#allocation7], 52
      %v586 = vpack.c.bf16 0.0, %v584
      %588 = vst [vmem:[%s585] sm:$0xf] %v586
      %s589 = scalar_lea.vmem %s218, 56
      %s590 = sadd.s32 %s219, 7
      %s591 = ssub.s32 7, %s590
      %p592 = scmp.lt.s32.totalorder %s591, 0
      %s593 = scalar_select %p592, 0, 255
      %s594 = sshrl.u32 %s593, 1
      %s595 = sor.u32 %s593, %s594
      %s596 = sand.u32 %s595, 85
      %s597 = sshrl.u32 %s596, 1
      %s598 = sor.u32 %s596, %s597
      %s599 = sand.u32 51, %s598
      %s600 = sshrl.u32 %s599, 2
      %s601 = sor.u32 %s599, %s600
      %s602 = sand.u32 15, %s601
      %v603 = vld [vmem:[%s589] sm:%s602]
      %v604 = vunpack.c.l.bf16 %v603
      %v605 = vunpack.c.h.bf16 %v603
      %s606 = sadd.s32 %s219, 7
      %s607 = ssub.s32 7, %s606
      %v608 = vstv %s607
      %vm609 = vcmp.lt.s32.totalorder %v608, 0
      %v610 = vsel %vm609, %v10, %v604
      %s611 = scalar_lea.vmem [#allocation7], 56
      %v612 = vpack.c.bf16 0.0, %v610
      %614 = vst [vmem:[%s611] sm:$0xf] %v612
      %s615 = scalar_lea.vmem %s218, 60
      %s616 = sadd.s32 %s219, 7
      %s617 = ssub.s32 7, %s616
      %p618 = scmp.lt.s32.totalorder %s617, 0
      %s619 = scalar_select %p618, 0, 255
      %s620 = sshrl.u32 %s619, 1
      %s621 = sor.u32 %s619, %s620
      %s622 = sand.u32 %s621, 85
      %s623 = sshrl.u32 %s622, 1
      %s624 = sor.u32 %s622, %s623
      %s625 = sand.u32 51, %s624
      %s626 = sshrl.u32 %s625, 2
      %s627 = sor.u32 %s625, %s626
      %s628 = sand.u32 15, %s627
      %v629 = vld [vmem:[%s615] sm:%s628]
      %v630 = vunpack.c.l.bf16 %v629
      %v631 = vunpack.c.h.bf16 %v629
      %s632 = sadd.s32 %s219, 7
      %s633 = ssub.s32 7, %s632
      %v634 = vstv %s633
      %vm635 = vcmp.lt.s32.totalorder %v634, 0
      %v636 = vsel %vm635, %v10, %v630
      %s637 = scalar_lea.vmem [#allocation7], 60
      %v638 = vpack.c.bf16 0.0, %v636
      %640 = vst [vmem:[%s637] sm:$0xf] %v638
      %s641 = scalar_lea.vmem [#allocation7], 64
      %v642 = vpack.c.bf16 0.0, %v10
      %644 = vst [vmem:[%s641] sm:$0xf] %v642
      %s645 = scalar_lea.vmem [#allocation7], 68
      %v646 = vpack.c.bf16 0.0, %v10
      %648 = vst [vmem:[%s645] sm:$0xf] %v646
      %s649 = scalar_lea.vmem [#allocation7], 72
      %v650 = vpack.c.bf16 0.0, %v10
      %652 = vst [vmem:[%s649] sm:$0xf] %v650
      %s653 = scalar_lea.vmem [#allocation7], 76
      %v654 = vpack.c.bf16 0.0, %v10
      %656 = vst [vmem:[%s653] sm:$0xf] %v654
      %s657 = scalar_lea.vmem [#allocation7], 80
      %v658 = vpack.c.bf16 0.0, %v10
      %660 = vst [vmem:[%s657] sm:$0xf] %v658
      %s661 = scalar_lea.vmem [#allocation7], 84
      %v662 = vpack.c.bf16 0.0, %v10
      %664 = vst [vmem:[%s661] sm:$0xf] %v662
      %s665 = scalar_lea.vmem [#allocation7], 88
      %v666 = vpack.c.bf16 0.0, %v10
      %668 = vst [vmem:[%s665] sm:$0xf] %v666
      %s669 = scalar_lea.vmem [#allocation7], 92
      %v670 = vpack.c.bf16 0.0, %v10
      %672 = vst [vmem:[%s669] sm:$0xf] %v670
      %s673 = scalar_lea.vmem [#allocation7], 96
      %v674 = vpack.c.bf16 0.0, %v10
      %676 = vst [vmem:[%s673] sm:$0xf] %v674
      %s677 = scalar_lea.vmem [#allocation7], 100
      %v678 = vpack.c.bf16 0.0, %v10
      %680 = vst [vmem:[%s677] sm:$0xf] %v678
      %s681 = scalar_lea.vmem [#allocation7], 104
      %v682 = vpack.c.bf16 0.0, %v10
      %684 = vst [vmem:[%s681] sm:$0xf] %v682
      %s685 = scalar_lea.vmem [#allocation7], 108
      %v686 = vpack.c.bf16 0.0, %v10
      %688 = vst [vmem:[%s685] sm:$0xf] %v686
      %s689 = scalar_lea.vmem [#allocation7], 112
      %v690 = vpack.c.bf16 0.0, %v10
      %692 = vst [vmem:[%s689] sm:$0xf] %v690
      %s693 = scalar_lea.vmem [#allocation7], 116
      %v694 = vpack.c.bf16 0.0, %v10
      %696 = vst [vmem:[%s693] sm:$0xf] %v694
      %s697 = scalar_lea.vmem [#allocation7], 120
      %v698 = vpack.c.bf16 0.0, %v10
      %700 = vst [vmem:[%s697] sm:$0xf] %v698
      %s701 = scalar_lea.vmem [#allocation7], 124
      %v702 = vpack.c.bf16 0.0, %v10
      %704 = vst [vmem:[%s701] sm:$0xf] %v702
      %v706 = vld [vmem:[#allocation7] sm:$0xff]
      %v707 = vld [vmem:[#allocation7 + $0x8] sm:$0xff]
      %v708 = vld [vmem:[#allocation7 + $0x10] sm:$0xff]
      %v709 = vld [vmem:[#allocation7 + $0x18] sm:$0xff]
      %v710 = vld [vmem:[#allocation7 + $0x20] sm:$0xff]
      %v711 = vld [vmem:[#allocation7 + $0x28] sm:$0xff]
      %v712 = vld [vmem:[#allocation7 + $0x30] sm:$0xff]
      %v713 = vld [vmem:[#allocation7 + $0x38] sm:$0xff]
      %v714 = vld [vmem:[#allocation7 + $0x40] sm:$0xff]
      %v715 = vld [vmem:[#allocation7 + $0x48] sm:$0xff]
      %v716 = vld [vmem:[#allocation7 + $0x50] sm:$0xff]
      %v717 = vld [vmem:[#allocation7 + $0x58] sm:$0xff]
      %v718 = vld [vmem:[#allocation7 + $0x60] sm:$0xff]
      %v719 = vld [vmem:[#allocation7 + $0x68] sm:$0xff]
      %v720 = vld [vmem:[#allocation7 + $0x70] sm:$0xff]
      %v721 = vld [vmem:[#allocation7 + $0x78] sm:$0xff]
      %v722 = vld [vmem:[%s0] sm:$0xff]
      %v723 = vld [vmem:[%s0 + $0x8] sm:$0xff]
      %v724 = vld [vmem:[%s0 + $0x10] sm:$0xff]
      %v725 = vld [vmem:[%s0 + $0x18] sm:$0xff]
      %v726 = vld [vmem:[%s1] sm:$0xff]
      %v727 = vld [vmem:[%s1 + $0x8] sm:$0xff]
      %v728 = vld [vmem:[%s1 + $0x10] sm:$0xff]
      %v729 = vld [vmem:[%s1 + $0x18] sm:$0xff]
      %731 = vset.pattern.permute.xlu0 0
      %732 = vperm.xlu0 %731, %v726
      %v733 = vpop.permute.xlu0 %732
      %736 = vset.pattern.permute.xlu0 0
      %737 = vperm.xlu0 %736, %v727
      %v738 = vpop.permute.xlu0 %737
      %741 = vset.pattern.permute.xlu0 0
      %742 = vperm.xlu0 %741, %v728
      %v743 = vpop.permute.xlu0 %742
      %746 = vset.pattern.permute.xlu0 0
      %747 = vperm.xlu0 %746, %v729
      %v748 = vpop.permute.xlu0 %747
      %v754 = vunpack.c.l.b16 %v722
      %v755 = vunpack.c.h.b16 %v722
      %v756 = vunpack.c.l.b16 %v723
      %v757 = vunpack.c.h.b16 %v723
      %v758 = vunpack.c.l.b16 %v724
      %v759 = vunpack.c.h.b16 %v724
      %v760 = vunpack.c.l.b16 %v725
      %v761 = vunpack.c.h.b16 %v725
      %v762 = vpack.c.b16 %v756, %v754
      %v763 = vpack.c.b16 %v757, %v755
      %v764 = vpack.c.b16 %v760, %v758
      %v765 = vpack.c.b16 %v761, %v759
      %v786 = vunpack.c.l.b16 %v706
      %v787 = vunpack.c.h.b16 %v706
      %v788 = vunpack.c.l.b16 %v707
      %v789 = vunpack.c.h.b16 %v707
      %v790 = vunpack.c.l.b16 %v708
      %v791 = vunpack.c.h.b16 %v708
      %v792 = vunpack.c.l.b16 %v709
      %v793 = vunpack.c.h.b16 %v709
      %v794 = vunpack.c.l.b16 %v710
      %v795 = vunpack.c.h.b16 %v710
      %v796 = vunpack.c.l.b16 %v711
      %v797 = vunpack.c.h.b16 %v711
      %v798 = vunpack.c.l.b16 %v712
      %v799 = vunpack.c.h.b16 %v712
      %v800 = vunpack.c.l.b16 %v713
      %v801 = vunpack.c.h.b16 %v713
      %v802 = vunpack.c.l.b16 %v714
      %v803 = vunpack.c.h.b16 %v714
      %v804 = vunpack.c.l.b16 %v715
      %v805 = vunpack.c.h.b16 %v715
      %v806 = vunpack.c.l.b16 %v716
      %v807 = vunpack.c.h.b16 %v716
      %v808 = vunpack.c.l.b16 %v717
      %v809 = vunpack.c.h.b16 %v717
      %v810 = vunpack.c.l.b16 %v718
      %v811 = vunpack.c.h.b16 %v718
      %v812 = vunpack.c.l.b16 %v719
      %v813 = vunpack.c.h.b16 %v719
      %v814 = vunpack.c.l.b16 %v720
      %v815 = vunpack.c.h.b16 %v720
      %v816 = vunpack.c.l.b16 %v721
      %v817 = vunpack.c.h.b16 %v721
      %v818 = vpack.c.b16 %v788, %v786
      %v819 = vpack.c.b16 %v789, %v787
      %v820 = vpack.c.b16 %v792, %v790
      %v821 = vpack.c.b16 %v793, %v791
      %v822 = vpack.c.b16 %v796, %v794
      %v823 = vpack.c.b16 %v797, %v795
      %v824 = vpack.c.b16 %v800, %v798
      %v825 = vpack.c.b16 %v801, %v799
      %v826 = vpack.c.b16 %v804, %v802
      %v827 = vpack.c.b16 %v805, %v803
      %v828 = vpack.c.b16 %v808, %v806
      %v829 = vpack.c.b16 %v809, %v807
      %v830 = vpack.c.b16 %v812, %v810
      %v831 = vpack.c.b16 %v813, %v811
      %v832 = vpack.c.b16 %v816, %v814
      %v833 = vpack.c.b16 %v817, %v815
      %850 = vmatprep.subr.bf16.mxu0 %v819
      %851 = vmatpush1.bf16.xpose.msra.mxu0 %v818
      %852 = vmatprep.subr.bf16.mxu0 %v821
      %853 = vmatpush1.bf16.xpose.msra.mxu0 %v820
      %854 = vmatprep.subr.bf16.mxu0 %v823
      %855 = vmatpush1.bf16.xpose.msra.mxu0 %v822
      %856 = vmatprep.subr.bf16.mxu0 %v825
      %857 = vmatpush1.bf16.xpose.msra.mxu0 %v824
      %858 = vmatprep.subr.bf16.mxu0 %v827
      %859 = vmatpush1.bf16.xpose.msra.mxu0 %v826
      %860 = vmatprep.subr.bf16.mxu0 %v829
      %861 = vmatpush1.bf16.xpose.msra.mxu0 %v828
      %862 = vmatprep.subr.bf16.mxu0 %v831
      %863 = vmatpush1.bf16.xpose.msra.mxu0 %v830
      %864 = vmatprep.subr.bf16.mxu0 %v833
      %865 = vmatpush1.bf16.xpose.msra.mxu0 %v832
      %866 = vmatprep.subr.bf16.mxu0 0
      %867 = vmatpush1.bf16.xpose.msra.mxu0 0
      %868 = vmatprep.subr.bf16.mxu0 0
      %869 = vmatpush1.bf16.xpose.msra.mxu0 0
      %870 = vmatprep.subr.bf16.mxu0 0
      %871 = vmatpush1.bf16.xpose.msra.mxu0 0
      %872 = vmatprep.subr.bf16.mxu0 0
      %873 = vmatpush1.bf16.xpose.msra.mxu0 0
      %874 = vmatprep.subr.bf16.mxu0 0
      %875 = vmatpush1.bf16.xpose.msra.mxu0 0
      %876 = vmatprep.subr.bf16.mxu0 0
      %877 = vmatpush1.bf16.xpose.msra.mxu0 0
      %878 = vmatprep.subr.bf16.mxu0 0
      %879 = vmatpush1.bf16.xpose.msra.mxu0 0
      %880 = vmatprep.subr.bf16.mxu0 0
      %881 = vmatpush1.bf16.xpose.msra.mxu0 0
      %882 = vmatprep.mubr.bf16.mxu0 %v763
      %883 = vmatmul.mubr.bf16.gmra.mrb[0].mxu0 %v762
      %v884 = vpop.f32.mrb[0].mxu0
      %v885 = vadd.f32 %v733, %v884
      %v886 = vpop.f32.mrb[0].mxu0
      %v887 = vpop.f32.mrb[0].mxu0
      %v888 = vadd.f32 %v738, %v887
      %v889 = vpop.f32.mrb[0].mxu0
      %890 = vmatprep.mubr.bf16.mxu0 %v765
      %891 = vmatmul.mubr.bf16.gmra.mrb[0].mxu0 %v764
      %v892 = vpop.f32.mrb[0].mxu0
      %v893 = vadd.f32 %v743, %v892
      %v894 = vpop.f32.mrb[0].mxu0
      %v895 = vpop.f32.mrb[0].mxu0
      %v896 = vadd.f32 %v748, %v895
      %v897 = vpop.f32.mrb[0].mxu0
      %898 = vdwg.mxu0
      %v899 = vadd.f32 %v885, %v888
      %v900 = vadd.f32 %v899, %v893
      %v901 = vadd.f32 %v900, %v896
      %v902 = vrot.slane %v901, 4
      %v903 = vadd.f32 %v901, %v902
      %v904 = vrot.slane %v903, 2
      %v905 = vadd.f32 %v903, %v904
      %v906 = vrot.slane %v905, 1
      %v907 = vadd.f32 %v905, %v906
      %v908 = vrcp.pop 32.0
      %v909 = vmul.f32 %v907, %v908
      %v910 = vsub.f32 %v885, %v909
      %v911 = vsub.f32 %v888, %v909
      %v912 = vsub.f32 %v893, %v909
      %v913 = vsub.f32 %v896, %v909
      %v914 = vmul.f32 %v910, %v910
      %v915 = vmul.f32 %v911, %v911
      %v916 = vmul.f32 %v912, %v912
      %v917 = vmul.f32 %v913, %v913
      %v918 = vadd.f32 %v914, %v915
      %v919 = vadd.f32 %v918, %v916
      %v920 = vadd.f32 %v919, %v917
      %v921 = vrot.slane %v920, 4
      %v922 = vadd.f32 %v920, %v921
      %v923 = vrot.slane %v922, 2
      %v924 = vadd.f32 %v922, %v923
      %v925 = vrot.slane %v924, 1
      %v926 = vadd.f32 %v924, %v925
      %v927 = vmul.f32 %v926, %v908
      %v928 = vadd.f32 %v927, 1e-05
      %v929 = vrsqrt.pop %v928
      %v930 = vmul.f32 %v910, %v929
      %v931 = vmul.f32 %v911, %v929
      %v932 = vmul.f32 %v912, %v929
      %v933 = vmul.f32 %v913, %v929
      %934 = vset.pattern.permute.xlu0 1
      %935 = vperm.xlu0 %934, %v726
      %v936 = vpop.permute.xlu0 %935
      %938 = vset.pattern.permute.xlu0 1
      %939 = vperm.xlu0 %938, %v727
      %v940 = vpop.permute.xlu0 %939
      %942 = vset.pattern.permute.xlu0 1
      %943 = vperm.xlu0 %942, %v728
      %v944 = vpop.permute.xlu0 %943
      %946 = vset.pattern.permute.xlu0 1
      %947 = vperm.xlu0 %946, %v729
      %v948 = vpop.permute.xlu0 %947
      %v950 = vmul.f32 %v930, %v936
      %v951 = vmul.f32 %v931, %v940
      %v952 = vmul.f32 %v932, %v944
      %v953 = vmul.f32 %v933, %v948
      %954 = vset.pattern.permute.xlu0 2
      %955 = vperm.xlu0 %954, %v726
      %v956 = vpop.permute.xlu0 %955
      %958 = vset.pattern.permute.xlu0 2
      %959 = vperm.xlu0 %958, %v727
      %v960 = vpop.permute.xlu0 %959
      %962 = vset.pattern.permute.xlu0 2
      %963 = vperm.xlu0 %962, %v728
      %v964 = vpop.permute.xlu0 %963
      %966 = vset.pattern.permute.xlu0 2
      %967 = vperm.xlu0 %966, %v729
      %v968 = vpop.permute.xlu0 %967
      %v970 = vadd.f32 %v950, %v956
      %v971 = vadd.f32 %v951, %v960
      %v972 = vadd.f32 %v952, %v964
      %v973 = vadd.f32 %v953, %v968
      %974 = vst [vmem:[%s230] sm:$0xff] %v970
      %975 = vst [vmem:[%s230 + $0x8] sm:$0xff] %v971
      %976 = vst [vmem:[%s230 + $0x10] sm:$0xff] %v972
      %977 = vst [vmem:[%s230 + $0x18] sm:$0xff] %v973
      %p978 = scmp.lt.s32.totalorder %s24, 1
      %s979 = scalar_select %p978, %s24, 1
      %p980 = scmp.lt.s32.totalorder %s25, 0
      %s981 = scalar_select %p980, %s25, 0
      %s982 = smul.addr %s979, 4
      %s983 = sadd.s32 %s981, %s982
      %s984 = smul.addr %s983, 8
      %s985 = scalar_lea.vmem %s4, %s984
      // Predicated region
      $region33: #{patch_embed_forward.2} parent=31 // pred_check
        %p986 = pneg %p122
      $region34: #{patch_embed_forward.2} parent=31 // pred_check_branch
        %988 = sbr.rel (%p986) target = $region36
      $region35: #{patch_embed_forward.2} parent=31 // pred_region
        _
      $region36: #{patch_embed_forward.2} parent=31 // pred_fallthru
        _
    $region32: #{patch_embed_forward.2} parent=5 // pred_fallthru
      _
    %p989 = scmp.le.s32.totalorder 2, %s15
    // Predicated region
    $region37: #{patch_embed_forward.2} parent=5 // pred_check
      %p990 = pneg %p989
    $region38: #{patch_embed_forward.2} parent=5 // pred_check_branch
      %992 = sbr.rel (%p990) target = $region40
    $region39: #{patch_embed_forward.2} parent=5 // pred_region
      %s993 = ssub.s32 %s15, 2
      // Predicated region
      $region41: #{patch_embed_forward.2} parent=39 // pred_check
        %p994 = pneg %p128
      $region42: #{patch_embed_forward.2} parent=39 // pred_check_branch
        %996 = sbr.rel (%p994) target = $region44
      $region43: #{patch_embed_forward.2} parent=39 // pred_region
        %p997 = scmp.lt.s32.totalorder %s26, 1
        %s998 = scalar_select %p997, %s26, 1
        %p999 = scmp.lt.s32.totalorder %s27, 0
        %s1000 = scalar_select %p999, %s27, 0
        %s1001 = smul.addr %s998, 4
        %s1002 = sadd.s32 %s1000, %s1001
        %s1003 = smul.addr %s1002, 8
        %s1004 = scalar_lea.vmem %s4, %s1003
      $region44: #{patch_embed_forward.2} parent=39 // pred_fallthru
        _
    $region40: #{patch_embed_forward.2} parent=5 // pred_fallthru
      _
  $region6: #{patch_embed_forward.2} parent=0 // loop_footer
    %s19 = sadd.s32 1, %s15
  $region7: #{patch_embed_forward.2} parent=0 // loop_footer_branch
    %14 = sbr.rel target = $region3
  $region8: #{patch_embed_forward.2} parent=0 // loop_exit
    _

</llo_original>
